<compile_context>
chip_gen: v6e
topology: v6e:2x2x1
jax: 0.10.0
libtpu: 0.0.40
codegen_flags: <defaults>
</compile_context>

<pallas_src>
import functools

import jax
import jax.numpy as jnp
import numpy as np
from jax.experimental import pallas as pl
from jax.experimental.pallas import tpu as pltpu


# ---------------------------------------------------------------------------
# helpers
# ---------------------------------------------------------------------------
def _pair_mag2(x, eps):
    """|z|^2 + eps replicated on both lanes of each interleaved (re, im) pair.

    x has shape (..., L) with L even; lanes (2j, 2j+1) hold (re, im) of one complex
    coefficient.  Uses XLU rolls (free slots under a mem-bound kernel).
    """
    s = x * x
    axis = x.ndim - 1
    lanes = x.shape[-1]
    nxt = pltpu.roll(s, shift=lanes - 1, axis=axis)   # s[(j + 1) % lanes]
    prv = pltpu.roll(s, shift=1, axis=axis)           # s[(j - 1) % lanes]
    lane_idx = jax.lax.broadcasted_iota(jnp.int32, x.shape, dimension=axis)
    partner = jnp.where((lane_idx & 1) == 0, nxt, prv)
    return s + partner + eps


def _pick_lane_tile(hw2, ck, target_bytes=1 << 20):
    """Largest multiple-of-128 lane tile that divides hw2 and keeps a block ~<=1MiB."""
    if hw2 % 128 != 0:
        return hw2                       # full-extent block (exempt from (8,128) rule)
    max_lt = max(128, (target_bytes // (ck * 4)) // 128 * 128)
    lt = min(hw2, max_lt)
    while hw2 % lt != 0:
        lt -= 128
    return lt


# ---------------------------------------------------------------------------
# pass 1: per-(C,6) statistics + EMA update
# ---------------------------------------------------------------------------
def _stats_kernel(ema_ref, x_ref, ema_out_ref, acc_r_ref, acc_m2_ref, *,
                  alpha, inv_sz, eps):
    n = pl.program_id(0)
    l = pl.program_id(1)

    @pl.when((n == 0) & (l == 0))
    def _():
        acc_r_ref[...] = jnp.zeros_like(acc_r_ref)
        acc_m2_ref[...] = jnp.zeros_like(acc_m2_ref)

    x = x_ref[0]                          # (CK, LT) interleaved re/im on lanes
    mag2 = _pair_mag2(x, eps)             # m2 comes from the pre-sqrt quantity
    r = jnp.sqrt(mag2)

    lt = x.shape[-1]
    if lt % 128 == 0:
        # partial sums as (CK, 128) vectors: pure VALU adds per tile,
        # single XLU cross-lane reduce only at the final grid step.
        g = lt // 128
        r_part = r[:, 0:128]
        m_part = mag2[:, 0:128]
        for i in range(1, g):
            r_part = r_part + r[:, i * 128:(i + 1) * 128]
            m_part = m_part + mag2[:, i * 128:(i + 1) * 128]
        acc_r_ref[...] += r_part
        acc_m2_ref[...] += m_part
    else:
        acc_r_ref[:, 0:1] += jnp.sum(r, axis=-1, keepdims=True)
        acc_m2_ref[:, 0:1] += jnp.sum(mag2, axis=-1, keepdims=True)

    @pl.when((n == pl.num_programs(0) - 1) & (l == pl.num_programs(1) - 1))
    def _():
        half = 0.5 * inv_sz               # every pair was counted on both of its lanes
        mu = jnp.sum(acc_r_ref[...], axis=-1, keepdims=True) * half
        m2 = jnp.sum(acc_m2_ref[...], axis=-1, keepdims=True) * half
        std = jnp.sqrt(jnp.maximum(m2 - mu * mu, 0.0))
        ema_out_ref[...] = alpha * ema_ref[...] + (1.0 - alpha) * std


# ---------------------------------------------------------------------------
# pass 2: soft shrinkage with the updated threshold
# ---------------------------------------------------------------------------
def _apply_kernel(ema_ref, x_ref, y_ref, *, k, eps):
    x = x_ref[0]                          # (CK, LT)
    mag2 = _pair_mag2(x, eps)
    r = jnp.sqrt(mag2)
    t = ema_ref[...] * k                  # (CK, 1) broadcast over lanes
    denom = r + (r < t).astype(r.dtype)
    gain = jnp.maximum(r - t, 0.0) * pl.reciprocal(denom, approx=False)
    # gain is identical on the (re, im) lanes of each pair -> no de-interleave needed.
    y_ref[0] = x * gain


# ---------------------------------------------------------------------------
# wrapper
# ---------------------------------------------------------------------------
def sparsify_wave_coeffs_std_bp(x, ema, step, *, q=0.5, alpha=0.9, warmup=0):
    """Forward of SparsifyWaveCoeffs_std with bp=True, soft=True, training=True.

    Args:
      x:    (N, C, 6, H, W, 2) float32 bandpass coefficients.
      ema:  (C, 6) float32 running std estimate.
      step: python int, current step counter.

    Returns: (y, new_ema, new_step)
    """
    if x.size == 0:                        # mirrors the x.shape == Size([0]) branch
        return x, ema, step + 1

    N, C, K, H, W, two = x.shape
    assert two == 2 and K == 6
    k = float(-np.log(1.0 - q + 1e-6))
    CK = C * K
    HW2 = H * W * 2
    inv_sz = 1.0 / float(N * H * W)
    eps = 1e-6

    # Pure views (adjacent-dim collapses): no HBM relayout traffic.
    x_view = x.reshape(N, CK, HW2).astype(jnp.float32)
    ema_in = ema.reshape(CK, 1).astype(jnp.float32)

    LT = _pick_lane_tile(HW2, CK)
    num_lt = HW2 // LT
    grid = (N, num_lt)
    vmem_limit = 32 * 1024 * 1024          # safe on v5e/v6e/v7x with ~<=1MiB blocks

    # ---- pass 1: statistics + EMA update (training mode) ----
    stats_kernel = functools.partial(
        _stats_kernel, alpha=float(alpha), inv_sz=inv_sz, eps=eps)
    ema_new = pl.pallas_call(
        stats_kernel,
        out_shape=jax.ShapeDtypeStruct((CK, 1), jnp.float32),
        grid_spec=pltpu.PrefetchScalarGridSpec(
            num_scalar_prefetch=0,
            grid=grid,
            in_specs=[
                pl.BlockSpec((CK, 1), lambda n, l: (0, 0)),          # old ema
                pl.BlockSpec((1, CK, LT), lambda n, l: (n, 0, l)),   # x tile
            ],
            out_specs=pl.BlockSpec((CK, 1), lambda n, l: (0, 0)),
            scratch_shapes=[pltpu.VMEM((CK, 128), jnp.float32),      # sum r
                            pltpu.VMEM((CK, 128), jnp.float32)],     # sum |z|^2
        ),
        compiler_params=pltpu.CompilerParams(
            dimension_semantics=("arbitrary", "arbitrary"),
            vmem_limit_bytes=vmem_limit),
    )(ema_in, x_view)

    new_ema = ema_new.reshape(C, K)

    if step < warmup:
        # warmup: statistics (EMA) are still updated, output passes through.
        return x, new_ema, step + 1

    # ---- pass 2: apply the soft shrinkage ----
    # NOTE: if the caller does not need x afterwards, input_output_aliases={1: 0}
    # could alias x_view -> y_view to halve peak HBM footprint.
    apply_kernel = functools.partial(_apply_kernel, k=k, eps=eps)
    y_view = pl.pallas_call(
        apply_kernel,
        out_shape=jax.ShapeDtypeStruct((N, CK, HW2), jnp.float32),
        grid_spec=pltpu.PrefetchScalarGridSpec(
            num_scalar_prefetch=0,
            grid=grid,
            in_specs=[
                pl.BlockSpec((CK, 1), lambda n, l: (0, 0)),          # new ema
                pl.BlockSpec((1, CK, LT), lambda n, l: (n, 0, l)),   # x tile
            ],
            out_specs=pl.BlockSpec((1, CK, LT), lambda n, l: (n, 0, l)),
        ),
        compiler_params=pltpu.CompilerParams(
            dimension_semantics=("parallel", "parallel"),
            vmem_limit_bytes=vmem_limit),
    )(ema_new, x_view)

    y = y_view.reshape(N, C, K, H, W, 2).astype(x.dtype)   # pure view back
    return y, new_ema, step + 1


# ---------------------------------------------------------------------------
# pure-JAX reference (mirrors the PyTorch forward: bp=True, soft=True, training)
# ---------------------------------------------------------------------------
def _reference(x, ema, *, q=0.5, alpha=0.9):
    k = -np.log(1.0 - q + 1e-6)
    N, C, K, H, W, _ = x.shape
    eps = 1e-6
    r = jnp.sqrt(x[..., 0] ** 2 + x[..., 1] ** 2 + eps)       # (N,C,6,H,W)
    sz = N * H * W
    mu = jnp.sum(r, axis=(0, 3, 4)) / sz                      # (C,6)
    m2 = jnp.sum(r * r, axis=(0, 3, 4)) / sz                  # (C,6)
    std = jnp.sqrt(jax.nn.relu(m2 - mu ** 2))
    new_ema = alpha * ema + (1 - alpha) * std
    t = (new_ema * k)[None, :, :, None, None]                 # (1,C,6,1,1)
    denom = r + (r < t).astype(r.dtype)
    gain = jax.nn.relu(r - t) / denom
    y = x * gain[..., None]
    return y, new_ema


if __name__ == "__main__":
    key = jax.random.PRNGKey(0)
    N, C, H, W = 2, 4, 16, 16
    x = jax.random.normal(key, (N, C, 6, H, W, 2), dtype=jnp.float32)
    ema0 = jnp.zeros((C, 6), dtype=jnp.float32)

    # warmup=0 so the shrinkage path (the interesting compute) is exercised
    y, new_ema, step = sparsify_wave_coeffs_std_bp(
        x, ema0, step=0, q=0.5, alpha=0.9, warmup=0)
    y = jax.block_until_ready(y)
    new_ema = jax.block_until_ready(new_ema)

    y_ref, ema_ref = _reference(x, ema0, q=0.5, alpha=0.9)
    assert y.shape == x.shape and y.dtype == x.dtype
    np.testing.assert_allclose(np.asarray(new_ema), np.asarray(ema_ref),
                               rtol=1e-5, atol=2e-6)
    np.testing.assert_allclose(np.asarray(y), np.asarray(y_ref),
                               rtol=1e-5, atol=2e-6)
    print("KERNEL_OK")
</pallas_src>

<mosaic_0001>
module attributes {stable_mosaic.version = 11 : i64} {
  func.func @_stats_kernel(%arg0: i32, %arg1: i32, %arg2: memref<24x1xf32, #tpu.memory_space<vmem>>, %arg3: memref<1x24x512xf32, #tpu.memory_space<vmem>>, %arg4: memref<24x1xf32, #tpu.memory_space<vmem>>, %arg5: memref<24x128xf32, #tpu.memory_space<vmem>>, %arg6: memref<24x128xf32, #tpu.memory_space<vmem>>) attributes {dimension_semantics = [#tpu.dimension_semantics<arbitrary>, #tpu.dimension_semantics<arbitrary>], iteration_bounds = array<i64: 2, 1>, scalar_prefetch = 0 : i64, scratch_operands = 2 : i64, tpu.core_type = #tpu.core_type<tc>, window_params = [{pipeline_mode = #tpu.pipeline_mode<synchronous>, transform_indices = @transform_0, window_bounds = array<i64: 24, 1>}, {transform_indices = @transform_1, window_bounds = array<i64: 1, 24, 512>}, {pipeline_mode = #tpu.pipeline_mode<synchronous>, transform_indices = @transform_2, window_bounds = array<i64: 24, 1>}]} {
    %c0_i32 = arith.constant 0 : i32
    %0 = arith.cmpi eq, %arg0, %c0_i32 : i32
    %c0_i32_0 = arith.constant 0 : i32
    %1 = arith.cmpi eq, %arg1, %c0_i32_0 : i32
    %2 = arith.andi %0, %1 : i1
    %3 = arith.extui %2 : i1 to i32
    %c0_i32_1 = arith.constant 0 : i32
    %4 = arith.cmpi ne, %3, %c0_i32_1 : i32
    scf.if %4 {
      %cst_17 = arith.constant 0.000000e+00 : f32
      %45 = vector.broadcast %cst_17 : f32 to vector<24x128xf32>
      %c0_18 = arith.constant 0 : index
      %c0_19 = arith.constant 0 : index
      %46 = vector.load %arg5[%c0_18, %c0_19] : memref<24x128xf32, #tpu.memory_space<vmem>>, vector<24x128xf32>
      tpu.vector_store %arg5[%c0_18, %c0_19], %45 {strides = array<i32>} : memref<24x128xf32, #tpu.memory_space<vmem>>, vector<24x128xf32>,
      %cst_20 = arith.constant 0.000000e+00 : f32
      %47 = vector.broadcast %cst_20 : f32 to vector<24x128xf32>
      %c0_21 = arith.constant 0 : index
      %c0_22 = arith.constant 0 : index
      %48 = vector.load %arg6[%c0_21, %c0_22] : memref<24x128xf32, #tpu.memory_space<vmem>>, vector<24x128xf32>
      tpu.vector_store %arg6[%c0_21, %c0_22], %47 {strides = array<i32>} : memref<24x128xf32, #tpu.memory_space<vmem>>, vector<24x128xf32>,
    } else {
    }
    %c0 = arith.constant 0 : index
    %c0_2 = arith.constant 0 : index
    %c0_3 = arith.constant 0 : index
    %5 = vector.load %arg3[%c0, %c0_2, %c0_3] : memref<1x24x512xf32, #tpu.memory_space<vmem>>, vector<1x24x512xf32>
    %6 = vector.shape_cast %5 : vector<1x24x512xf32> to vector<24x512xf32>
    %7 = arith.mulf %6, %6 : vector<24x512xf32>
    %c511_i32 = arith.constant 511 : i32
    %8 = tpu.dynamic_rotate %7 by %c511_i32 dim 1 : vector<24x512xf32>, i32 -> vector<24x512xf32>
    %c1_i32 = arith.constant 1 : i32
    %9 = tpu.dynamic_rotate %7 by %c1_i32 dim 1 : vector<24x512xf32>, i32 -> vector<24x512xf32>
    %10 = tpu.iota {dimensions = array<i32: 1>} : vector<24x512xi32>
    %c1_i32_4 = arith.constant 1 : i32
    %11 = vector.broadcast %c1_i32_4 : i32 to vector<24x512xi32>
    %12 = arith.andi %10, %11 : vector<24x512xi32>
    %c0_i32_5 = arith.constant 0 : i32
    %13 = vector.broadcast %c0_i32_5 : i32 to vector<24x512xi32>
    %14 = arith.cmpi eq, %12, %13 : vector<24x512xi32>
    %15 = arith.select %14, %8, %9 : vector<24x512xi1>, vector<24x512xf32>
    %16 = arith.addf %7, %15 : vector<24x512xf32>
    %cst = arith.constant 9.99999997E-7 : f32
    %17 = vector.broadcast %cst : f32 to vector<24x512xf32>
    %18 = arith.addf %16, %17 : vector<24x512xf32>
    %19 = math.sqrt %18 : vector<24x512xf32>
    %20 = vector.extract_strided_slice %19 {offsets = [0, 0], sizes = [24, 128], strides = [1, 1]} : vector<24x512xf32> to vector<24x128xf32>
    %21 = vector.extract_strided_slice %18 {offsets = [0, 0], sizes = [24, 128], strides = [1, 1]} : vector<24x512xf32> to vector<24x128xf32>
    %22 = vector.extract_strided_slice %19 {offsets = [0, 128], sizes = [24, 128], strides = [1, 1]} : vector<24x512xf32> to vector<24x128xf32>
    %23 = arith.addf %20, %22 : vector<24x128xf32>
    %24 = vector.extract_strided_slice %18 {offsets = [0, 128], sizes = [24, 128], strides = [1, 1]} : vector<24x512xf32> to vector<24x128xf32>
    %25 = arith.addf %21, %24 : vector<24x128xf32>
    %26 = vector.extract_strided_slice %19 {offsets = [0, 256], sizes = [24, 128], strides = [1, 1]} : vector<24x512xf32> to vector<24x128xf32>
    %27 = arith.addf %23, %26 : vector<24x128xf32>
    %28 = vector.extract_strided_slice %18 {offsets = [0, 256], sizes = [24, 128], strides = [1, 1]} : vector<24x512xf32> to vector<24x128xf32>
    %29 = arith.addf %25, %28 : vector<24x128xf32>
    %30 = vector.extract_strided_slice %19 {offsets = [0, 384], sizes = [24, 128], strides = [1, 1]} : vector<24x512xf32> to vector<24x128xf32>
    %31 = arith.addf %27, %30 : vector<24x128xf32>
    %32 = vector.extract_strided_slice %18 {offsets = [0, 384], sizes = [24, 128], strides = [1, 1]} : vector<24x512xf32> to vector<24x128xf32>
    %33 = arith.addf %29, %32 : vector<24x128xf32>
    %c0_6 = arith.constant 0 : index
    %c0_7 = arith.constant 0 : index
    %34 = vector.load %arg5[%c0_6, %c0_7] : memref<24x128xf32, #tpu.memory_space<vmem>>, vector<24x128xf32>
    %35 = arith.addf %34, %31 : vector<24x128xf32>
    %c0_8 = arith.constant 0 : index
    %c0_9 = arith.constant 0 : index
    %36 = vector.load %arg5[%c0_8, %c0_9] : memref<24x128xf32, #tpu.memory_space<vmem>>, vector<24x128xf32>
    tpu.vector_store %arg5[%c0_8, %c0_9], %35 {strides = array<i32>} : memref<24x128xf32, #tpu.memory_space<vmem>>, vector<24x128xf32>,
    %c0_10 = arith.constant 0 : index
    %c0_11 = arith.constant 0 : index
    %37 = vector.load %arg6[%c0_10, %c0_11] : memref<24x128xf32, #tpu.memory_space<vmem>>, vector<24x128xf32>
    %38 = arith.addf %37, %33 : vector<24x128xf32>
    %c0_12 = arith.constant 0 : index
    %c0_13 = arith.constant 0 : index
    %39 = vector.load %arg6[%c0_12, %c0_13] : memref<24x128xf32, #tpu.memory_space<vmem>>, vector<24x128xf32>
    tpu.vector_store %arg6[%c0_12, %c0_13], %38 {strides = array<i32>} : memref<24x128xf32, #tpu.memory_space<vmem>>, vector<24x128xf32>,
    %c1_i32_14 = arith.constant 1 : i32
    %40 = arith.cmpi eq, %arg0, %c1_i32_14 : i32
    %c0_i32_15 = arith.constant 0 : i32
    %41 = arith.cmpi eq, %arg1, %c0_i32_15 : i32
    %42 = arith.andi %40, %41 : i1
    %43 = arith.extui %42 : i1 to i32
    %c0_i32_16 = arith.constant 0 : i32
    %44 = arith.cmpi ne, %43, %c0_i32_16 : i32
    scf.if %44 {
      %c0_17 = arith.constant 0 : index
      %c0_18 = arith.constant 0 : index
      %45 = vector.load %arg5[%c0_17, %c0_18] : memref<24x128xf32, #tpu.memory_space<vmem>>, vector<24x128xf32>
      %cst_19 = arith.constant dense<0.000000e+00> : vector<24xf32>
      %46 = vector.multi_reduction <add>, %45, %cst_19 [1] : vector<24x128xf32> to vector<24xf32>
      %47 = vector.shape_cast %46 : vector<24xf32> to vector<24x1xf32>
      %cst_20 = arith.constant 9.765625E-4 : f32
      %48 = vector.broadcast %cst_20 : f32 to vector<24x1xf32>
      %49 = arith.mulf %47, %48 : vector<24x1xf32>
      %c0_21 = arith.constant 0 : index
      %c0_22 = arith.constant 0 : index
      %50 = vector.load %arg6[%c0_21, %c0_22] : memref<24x128xf32, #tpu.memory_space<vmem>>, vector<24x128xf32>
      %cst_23 = arith.constant dense<0.000000e+00> : vector<24xf32>
      %51 = vector.multi_reduction <add>, %50, %cst_23 [1] : vector<24x128xf32> to vector<24xf32>
      %52 = vector.shape_cast %51 : vector<24xf32> to vector<24x1xf32>
      %cst_24 = arith.constant 9.765625E-4 : f32
      %53 = vector.broadcast %cst_24 : f32 to vector<24x1xf32>
      %54 = arith.mulf %52, %53 : vector<24x1xf32>
      %55 = arith.mulf %49, %49 : vector<24x1xf32>
      %56 = arith.subf %54, %55 : vector<24x1xf32>
      %cst_25 = arith.constant 0.000000e+00 : f32
      %57 = vector.broadcast %cst_25 : f32 to vector<24x1xf32>
      %58 = arith.maximumf %56, %57 : vector<24x1xf32>
      %59 = math.sqrt %58 : vector<24x1xf32>
      %c0_26 = arith.constant 0 : index
      %c0_27 = arith.constant 0 : index
      %60 = vector.load %arg2[%c0_26, %c0_27] : memref<24x1xf32, #tpu.memory_space<vmem>>, vector<24x1xf32>
      %cst_28 = arith.constant 0.899999976 : f32
      %61 = vector.broadcast %cst_28 : f32 to vector<24x1xf32>
      %62 = arith.mulf %61, %60 : vector<24x1xf32>
      %cst_29 = arith.constant 1.000000e-01 : f32
      %63 = vector.broadcast %cst_29 : f32 to vector<24x1xf32>
      %64 = arith.mulf %63, %59 : vector<24x1xf32>
      %65 = arith.addf %62, %64 : vector<24x1xf32>
      %c0_30 = arith.constant 0 : index
      %c0_31 = arith.constant 0 : index
      %66 = vector.load %arg4[%c0_30, %c0_31] : memref<24x1xf32, #tpu.memory_space<vmem>>, vector<24x1xf32>
      tpu.vector_store %arg4[%c0_30, %c0_31], %65 {strides = array<i32>} : memref<24x1xf32, #tpu.memory_space<vmem>>, vector<24x1xf32>,
    } else {
    }
    return
  }
  func.func @transform_0(%arg0: i32, %arg1: i32) -> (i32, i32) {
    %c0_i32 = arith.constant 0 : i32
    %c0_i32_0 = arith.constant 0 : i32
    %c0_i32_1 = arith.constant 0 : i32
    return %c0_i32, %c0_i32_0 : i32, i32
  }
  func.func @transform_1(%arg0: i32, %arg1: i32) -> (i32, i32, i32) {
    %c0_i32 = arith.constant 0 : i32
    %c0_i32_0 = arith.constant 0 : i32
    return %arg0, %c0_i32, %arg1 : i32, i32, i32
  }
  func.func @transform_2(%arg0: i32, %arg1: i32) -> (i32, i32) {
    %c0_i32 = arith.constant 0 : i32
    %c0_i32_0 = arith.constant 0 : i32
    %c0_i32_1 = arith.constant 0 : i32
    return %c0_i32, %c0_i32_0 : i32, i32
  }
}

</mosaic_0001>

<llo_original>
// kernel: tpu_custom_call.1
$region0: #{tpu_custom_call.1}
  #allocation0 [shape = 'u32[]', space=smem, size = 0x4, offset = 0x4, fixed_abs, tag = 'smem constant byte address 0x4 - core index']
  #allocation1 [shape = 'u32[144,128]{1,0:T(1,128)}', space=vmem, size = 0x12000, scoped, tag = 'internal scratch']
  #allocation2 [shape = 'f32[24,128]{1,0:T(8,128)}', space=vmem, size = 0x3000, scoped, tag = 'scratch operand']
  #allocation3 [shape = 'f32[24,128]{1,0:T(8,128)}', space=vmem, size = 0x3000, scoped, tag = 'scratch operand']
  %s0 = inlined_call_operand.vmem [shape: f32[24,1], index: 0, kind: input, shape index: {}]
  %s1 = inlined_call_operand.hbm [shape: f32[2,24,512], index: 1, kind: input, shape index: {}]
  %s2 = inlined_call_operand.vmem [shape: f32[24,1], index: 2, kind: output, shape index: {}]
  %s3 = sld [smem:[#allocation0]]
  $region53: #{tpu_custom_call.1} parent=0
    _
  %s5 = ssub.s32 1, %s3
  %s6 = scalar_select 0, %s5, %s3
  $region1: #{tpu_custom_call.1} parent=0
    #allocation4 [shape = 'u8[98304]{0}', space=vmem, size = 0x18000, scoped, tag = 'input window, operand 1']
    #allocation5 [shape = 's32[2]{0}', space=sflag, size = 0x8, scoped, tag = 'scoped memory for tpu_custom_call.1']
    %7 = vsyncpa [#allocation5], 0
    %s8 = scalar_lea.sflag [#allocation5], 1
    %9 = vsyncpa %s8, 0
    loop: start=0, step=1, limit=4
    $region2: #{tpu_custom_call.1} parent=1 // loop_pre_header
      _
    $region3: #{tpu_custom_call.1} parent=1 // loop_header
      %s11 = sphi 0, %s15
      %p12 = scmp.ge.s32.totalorder %s11, 4
      %s18 = sphi 0, %s30
      %s19 = sphi 0, %s26
      %s20 = sphi 0, %s18
      %s21 = sphi 0, %s19
      %s22 = sphi 0, %s20
      %s23 = sphi 0, %s21
      %s31 = sphi 0, %s31
      %s33 = sphi 0, %s31
      %s34 = sphi 0, %s33
      %s48 = sphi 0, %s34
      %s56 = sphi 0, %s58
      %s59 = sphi 0, %s56
      %s60 = sphi 0, %s59
      %s76 = sphi 0, %s60
      %s80 = sphi 0, %s80
      %s82 = sphi 0, %s80
      %s83 = sphi 0, %s82
      %s97 = sphi 0, %s83
    $region4: #{tpu_custom_call.1} parent=1 // loop_header_branch
      %14 = sbr.rel (%p12) target = $region8
    $region5: #{tpu_custom_call.1} parent=1 // loop_body
      %s16 = ssub.s32 %s11, 1
      %s17 = ssub.s32 %s11, 2
      %s24 = sadd.s32 1, %s19
      %p25 = scmp.ge.s32.totalorder %s24, 1
      %s26 = scalar_select %p25, 0, %s24
      %s27 = sadd.s32 1, %s18
      %s28 = scalar_select %p25, %s27, %s18
      %p29 = scmp.ge.s32.totalorder %s28, 2
      %s30 = scalar_select %p29, 0, %s28
      %s32 = sadd.s32 %s31, 1
      %p35 = scmp.eq.s32.totalorder %s11, 1
      %p36 = scmp.ne.s32.totalorder %s31, %s33
      %p37 = scmp.eq.s32.totalorder %s11, 0
      %p38 = por %p36, %p37
      %p39 = scmp.ne.s32.totalorder %s31, %s33
      %p40 = scmp.eq.s32.totalorder %s16, 1
      %p41 = por %p39, %p40
      %p42 = scmp.ne.s32.totalorder %s33, %s34
      %p43 = scmp.eq.s32.totalorder %s16, 0
      %p44 = por %p42, %p43
      %p45 = scmp.ne.s32.totalorder %s33, %s34
      %p46 = scmp.eq.s32.totalorder %s17, 1
      %p47 = por %p45, %p46
      %p49 = scmp.ne.s32.totalorder %s34, %s48
      %p50 = scmp.eq.s32.totalorder %s17, 0
      %p51 = por %p49, %p50
      %s52 = ssub.s32 %s18, %s30
      %s53 = ssub.s32 %s19, %s26
      %s54 = sor.u32 %s52, %s53
      %p55 = scmp.eq.s32.totalorder %s54, 0
      %s57 = sadd.s32 %s56, 1
      %s58 = scalar_select %p55, %s56, %s57
      %p61 = pneg %p55
      %p62 = scmp.eq.s32.totalorder %s11, 1
      %p63 = por %p61, %p62
      %p64 = scmp.ne.s32.totalorder %s56, %s59
      %p65 = scmp.eq.s32.totalorder %s11, 0
      %p66 = por %p64, %p65
      %p67 = scmp.ne.s32.totalorder %s56, %s59
      %p68 = scmp.eq.s32.totalorder %s16, 1
      %p69 = por %p67, %p68
      %p70 = scmp.ne.s32.totalorder %s59, %s60
      %p71 = scmp.eq.s32.totalorder %s16, 0
      %p72 = por %p70, %p71
      %p73 = scmp.ne.s32.totalorder %s59, %s60
      %p74 = scmp.eq.s32.totalorder %s17, 1
      %p75 = por %p73, %p74
      %p77 = scmp.ne.s32.totalorder %s60, %s76
      %p78 = scmp.eq.s32.totalorder %s17, 0
      %p79 = por %p77, %p78
      %s81 = sadd.s32 %s80, 1
      %p84 = scmp.eq.s32.totalorder %s11, 1
      %p85 = scmp.ne.s32.totalorder %s80, %s82
      %p86 = scmp.eq.s32.totalorder %s11, 0
      %p87 = por %p85, %p86
      %p88 = scmp.ne.s32.totalorder %s80, %s82
      %p89 = scmp.eq.s32.totalorder %s16, 1
      %p90 = por %p88, %p89
      %p91 = scmp.ne.s32.totalorder %s82, %s83
      %p92 = scmp.eq.s32.totalorder %s16, 0
      %p93 = por %p91, %p92
      %p94 = scmp.ne.s32.totalorder %s82, %s83
      %p95 = scmp.eq.s32.totalorder %s17, 1
      %p96 = por %p94, %p95
      %p98 = scmp.ne.s32.totalorder %s83, %s97
      %p99 = scmp.eq.s32.totalorder %s17, 0
      %p100 = por %p98, %p99
      %p101 = scmp.le.s32.totalorder 1, %s11
      %p102 = scmp.lt.s32.totalorder %s11, 3
      %p103 = pnand %p101, %p102
      %p104 = pneg %p103
      // Predicated region
      $region9: #{tpu_custom_call.1} parent=5 // pred_check
        _
      $region10: #{tpu_custom_call.1} parent=5 // pred_check_branch
        %106 = sbr.rel (%p103) target = $region12
      $region11: #{tpu_custom_call.1} parent=5 // pred_region
        %s107 = ssub.s32 %s11, 1
        // Predicated region
        $region13: #{tpu_custom_call.1} parent=11 // pred_check
          %p108 = pneg %p44
        $region14: #{tpu_custom_call.1} parent=11 // pred_check_branch
          %110 = sbr.rel (%p108) target = $region16
        $region15: #{tpu_custom_call.1} parent=11 // pred_region
          _
        $region16: #{tpu_custom_call.1} parent=11 // pred_fallthru
          _
      $region12: #{tpu_custom_call.1} parent=5 // pred_fallthru
        _
      %p111 = scmp.lt.s32.totalorder %s11, 2
      // Predicated region
      $region17: #{tpu_custom_call.1} parent=5 // pred_check
        %p112 = pneg %p111
      $region18: #{tpu_custom_call.1} parent=5 // pred_check_branch
        %114 = sbr.rel (%p112) target = $region20
      $region19: #{tpu_custom_call.1} parent=5 // pred_region
        // Predicated region
        $region21: #{tpu_custom_call.1} parent=19 // pred_check
          %p115 = pneg %p66
        $region22: #{tpu_custom_call.1} parent=19 // pred_check_branch
          %117 = sbr.rel (%p115) target = $region24
        $region23: #{tpu_custom_call.1} parent=19 // pred_region
          %s118 = sand.u32 %s56, 1
          %s119 = scalar_lea.sflag [#allocation5], %s118
          %s120 = sand.u32 %s56, 1
          %s121 = smul.addr %s120, 96
          %s122 = scalar_lea.vmem [#allocation4], %s121
          %s123 = smul.u32 4, %s19
          %s125 = ssub.s32 1536, 1536
          %126 = vsyncadd %s119, %s125
          %s127 = smul.addr %s18, 12
          %s128 = sadd.s32 %s123, %s127
          %s129 = smul.addr %s128, 128
          %s130 = scalar_lea.hbm %s1, %s129
          %s131 = sshll.u32 %s122, 4
          %s132 = int_to_ptr.vmem [resolvable:$true] %s131
          %137 = dma.hbm_to_vmem [thread:$0]  %s130, 1536, %s132, %s119, 512, 512, 32
        $region24: #{tpu_custom_call.1} parent=19 // pred_fallthru
          _
      $region20: #{tpu_custom_call.1} parent=5 // pred_fallthru
        _
      %p138 = scmp.le.s32.totalorder 1, %s11
      %p139 = scmp.lt.s32.totalorder %s11, 3
      %p140 = pnand %p138, %p139
      %p141 = pneg %p140
      // Predicated region
      $region25: #{tpu_custom_call.1} parent=5 // pred_check
        _
      $region26: #{tpu_custom_call.1} parent=5 // pred_check_branch
        %143 = sbr.rel (%p140) target = $region28
      $region27: #{tpu_custom_call.1} parent=5 // pred_region
        %s144 = ssub.s32 %s11, 1
        %s145 = sand.u32 %s59, 1
        %s146 = scalar_lea.sflag [#allocation5], %s145
        %s147 = sand.u32 %s59, 1
        %s148 = smul.addr %s147, 96
        %s149 = scalar_lea.vmem [#allocation4], %s148
        // Predicated region
        $region29: #{tpu_custom_call.1} parent=27 // pred_check
          %p150 = pneg %p72
        $region30: #{tpu_custom_call.1} parent=27 // pred_check_branch
          %152 = sbr.rel (%p150) target = $region32
        $region31: #{tpu_custom_call.1} parent=27 // pred_region
          %153 = dma.done %s146, 1536
        $region32: #{tpu_custom_call.1} parent=27 // pred_fallthru
          _
        %p154 = pneg %p44
        %p155 = pneg %p41
        %s156 = sand.u32 %s59, 1
        %s157 = scalar_lea.sflag [#allocation5], %s156
        %s158 = sand.u32 %s59, 1
        %s159 = smul.addr %s158, 96
        %s160 = scalar_lea.vmem [#allocation4], %s159
        %p161 = pneg %p72
        %p162 = pneg %p69
        %p163 = pneg %p93
        %p164 = pneg %p90
        %s165 = smul.u32 4, %s21
        %p166 = scmp.eq.s32.totalorder %s20, 0
        %p167 = scmp.eq.s32.totalorder %s21, 0
        %p168 = pnand %p166, %p167
        %p169 = pneg %p168
        // Predicated region
        $region33: #{tpu_custom_call.1} parent=27 // pred_check
          _
        $region34: #{tpu_custom_call.1} parent=27 // pred_check_branch
          %171 = sbr.rel (%p168) target = $region36
        $region35: #{tpu_custom_call.1} parent=27 // pred_region
          %172 = vst [vmem:[#allocation2] sm:$0xff] 0.0
          %173 = vst [vmem:[#allocation2 + $0x8] sm:$0xff] 0.0
          %174 = vst [vmem:[#allocation2 + $0x10] sm:$0xff] 0.0
          %175 = vst [vmem:[#allocation3] sm:$0xff] 0.0
          %176 = vst [vmem:[#allocation3 + $0x8] sm:$0xff] 0.0
          %177 = vst [vmem:[#allocation3 + $0x10] sm:$0xff] 0.0
        $region36: #{tpu_custom_call.1} parent=27 // pred_fallthru
          _
        %v178 = vld [vmem:[%s149] sm:$0xff]
        %v179 = vld [vmem:[%s149 + $0x8] sm:$0xff]
        %v180 = vld [vmem:[%s149 + $0x10] sm:$0xff]
        %v181 = vld [vmem:[%s149 + $0x18] sm:$0xff]
        %v182 = vld [vmem:[%s149 + $0x20] sm:$0xff]
        %v183 = vld [vmem:[%s149 + $0x28] sm:$0xff]
        %v184 = vld [vmem:[%s149 + $0x30] sm:$0xff]
        %v185 = vld [vmem:[%s149 + $0x38] sm:$0xff]
        %v186 = vld [vmem:[%s149 + $0x40] sm:$0xff]
        %v187 = vld [vmem:[%s149 + $0x48] sm:$0xff]
        %v188 = vld [vmem:[%s149 + $0x50] sm:$0xff]
        %v189 = vld [vmem:[%s149 + $0x58] sm:$0xff]
        %v190 = vmul.f32 %v178, %v178
        %v191 = vmul.f32 %v179, %v179
        %v192 = vmul.f32 %v180, %v180
        %v193 = vmul.f32 %v181, %v181
        %v194 = vmul.f32 %v182, %v182
        %v195 = vmul.f32 %v183, %v183
        %v196 = vmul.f32 %v184, %v184
        %v197 = vmul.f32 %v185, %v185
        %v198 = vmul.f32 %v186, %v186
        %v199 = vmul.f32 %v187, %v187
        %v200 = vmul.f32 %v188, %v188
        %v201 = vmul.f32 %v189, %v189
        %202 = vrot.lane.b32.xlu0 %v190, 127
        %v203 = vpop.permute.xlu0 %202
        %204 = vrot.lane.b32.xlu0 %v194, 127
        %v205 = vpop.permute.xlu0 %204
        %206 = vrot.lane.b32.xlu0 %v198, 127
        %v207 = vpop.permute.xlu0 %206
        %208 = vrot.lane.b32.xlu0 %v191, 127
        %v209 = vpop.permute.xlu0 %208
        %210 = vrot.lane.b32.xlu0 %v195, 127
        %v211 = vpop.permute.xlu0 %210
        %212 = vrot.lane.b32.xlu0 %v199, 127
        %v213 = vpop.permute.xlu0 %212
        %214 = vrot.lane.b32.xlu0 %v192, 127
        %v215 = vpop.permute.xlu0 %214
        %216 = vrot.lane.b32.xlu0 %v196, 127
        %v217 = vpop.permute.xlu0 %216
        %218 = vrot.lane.b32.xlu0 %v200, 127
        %v219 = vpop.permute.xlu0 %218
        %220 = vrot.lane.b32.xlu0 %v193, 127
        %v221 = vpop.permute.xlu0 %220
        %222 = vrot.lane.b32.xlu0 %v197, 127
        %v223 = vpop.permute.xlu0 %222
        %224 = vrot.lane.b32.xlu0 %v201, 127
        %v225 = vpop.permute.xlu0 %224
        %v226 = vlaneseq
        %v227 = vand.u32 %v226, 127
        %vm228 = vcmp.lt.s32.totalorder %v227, 127
        %v229 = vsel %vm228, %v215, %v221
        %v230 = vsel %vm228, %v217, %v223
        %v231 = vsel %vm228, %v219, %v225
        %v232 = vsel %vm228, %v209, %v215
        %v233 = vsel %vm228, %v211, %v217
        %v234 = vsel %vm228, %v213, %v219
        %v235 = vsel %vm228, %v203, %v209
        %v236 = vsel %vm228, %v205, %v211
        %v237 = vsel %vm228, %v207, %v213
        %v238 = vsel %vm228, %v221, %v203
        %v239 = vsel %vm228, %v223, %v205
        %v240 = vsel %vm228, %v225, %v207
        %241 = vrot.lane.b32.xlu0 %v190, 1
        %v242 = vpop.permute.xlu0 %241
        %243 = vrot.lane.b32.xlu0 %v194, 1
        %v244 = vpop.permute.xlu0 %243
        %245 = vrot.lane.b32.xlu0 %v198, 1
        %v246 = vpop.permute.xlu0 %245
        %247 = vrot.lane.b32.xlu0 %v191, 1
        %v248 = vpop.permute.xlu0 %247
        %249 = vrot.lane.b32.xlu0 %v195, 1
        %v250 = vpop.permute.xlu0 %249
        %251 = vrot.lane.b32.xlu0 %v199, 1
        %v252 = vpop.permute.xlu0 %251
        %253 = vrot.lane.b32.xlu0 %v192, 1
        %v254 = vpop.permute.xlu0 %253
        %255 = vrot.lane.b32.xlu0 %v196, 1
        %v256 = vpop.permute.xlu0 %255
        %257 = vrot.lane.b32.xlu0 %v200, 1
        %v258 = vpop.permute.xlu0 %257
        %259 = vrot.lane.b32.xlu0 %v193, 1
        %v260 = vpop.permute.xlu0 %259
        %261 = vrot.lane.b32.xlu0 %v197, 1
        %v262 = vpop.permute.xlu0 %261
        %263 = vrot.lane.b32.xlu0 %v201, 1
        %v264 = vpop.permute.xlu0 %263
        %vm265 = vcmp.lt.s32.totalorder %v227, 1
        %v266 = vsel %vm265, %v254, %v260
        %v267 = vsel %vm265, %v256, %v262
        %v268 = vsel %vm265, %v258, %v264
        %v269 = vsel %vm265, %v248, %v254
        %v270 = vsel %vm265, %v250, %v256
        %v271 = vsel %vm265, %v252, %v258
        %v272 = vsel %vm265, %v242, %v248
        %v273 = vsel %vm265, %v244, %v250
        %v274 = vsel %vm265, %v246, %v252
        %v275 = vsel %vm265, %v260, %v242
        %v276 = vsel %vm265, %v262, %v244
        %v277 = vsel %vm265, %v264, %v246
        %v278 = vadd.s32 %v227, 128
        %v279 = vadd.s32 %v227, 256
        %v280 = vadd.s32 %v227, 384
        %v281 = vand.u32 %v227, 1
        %v282 = vand.u32 %v278, 1
        %v283 = vand.u32 %v279, 1
        %v284 = vand.u32 %v280, 1
        %vm285 = vcmp.eq.s32.totalorder %v281, 0
        %vm286 = vcmp.eq.s32.totalorder %v282, 0
        %vm287 = vcmp.eq.s32.totalorder %v283, 0
        %vm288 = vcmp.eq.s32.totalorder %v284, 0
        %v289 = vsel %vm285, %v235, %v275
        %v290 = vsel %vm286, %v232, %v272
        %v291 = vsel %vm287, %v229, %v269
        %v292 = vsel %vm288, %v238, %v266
        %v293 = vsel %vm285, %v236, %v276
        %v294 = vsel %vm286, %v233, %v273
        %v295 = vsel %vm287, %v230, %v270
        %v296 = vsel %vm288, %v239, %v267
        %v297 = vsel %vm285, %v237, %v277
        %v298 = vsel %vm286, %v234, %v274
        %v299 = vsel %vm287, %v231, %v271
        %v300 = vsel %vm288, %v240, %v268
        %v301 = vadd.f32 %v190, %v289
        %v302 = vadd.f32 %v191, %v290
        %v303 = vadd.f32 %v192, %v291
        %v304 = vadd.f32 %v193, %v292
        %v305 = vadd.f32 %v194, %v293
        %v306 = vadd.f32 %v195, %v294
        %v307 = vadd.f32 %v196, %v295
        %v308 = vadd.f32 %v197, %v296
        %v309 = vadd.f32 %v198, %v297
        %v310 = vadd.f32 %v199, %v298
        %v311 = vadd.f32 %v200, %v299
        %v312 = vadd.f32 %v201, %v300
        %v313 = vadd.f32 %v301, 1e-06
        %v314 = vadd.f32 %v302, 1e-06
        %v315 = vadd.f32 %v303, 1e-06
        %v316 = vadd.f32 %v304, 1e-06
        %v317 = vadd.f32 %v305, 1e-06
        %v318 = vadd.f32 %v306, 1e-06
        %v319 = vadd.f32 %v307, 1e-06
        %v320 = vadd.f32 %v308, 1e-06
        %v321 = vadd.f32 %v309, 1e-06
        %v322 = vadd.f32 %v310, 1e-06
        %v323 = vadd.f32 %v311, 1e-06
        %v324 = vadd.f32 %v312, 1e-06
        %v325 = vrsqrt.pop %v313
        %v326 = vmul.f32 %v313, %v325
        %vm327 = vcmp.eq.f32.partialorder %v313, inf
        %v328 = vsel %vm327, %v313, %v326
        %vm329 = vcmp.eq.f32.partialorder %v313, 0.0
        %v330 = vand.u32 %v313, 2147483648
        %v331 = vsel %vm329, %v330, %v328
        %v332 = vrsqrt.pop %v314
        %v333 = vmul.f32 %v314, %v332
        %vm334 = vcmp.eq.f32.partialorder %v314, inf
        %v335 = vsel %vm334, %v314, %v333
        %vm336 = vcmp.eq.f32.partialorder %v314, 0.0
        %v337 = vand.u32 %v314, 2147483648
        %v338 = vsel %vm336, %v337, %v335
        %v339 = vrsqrt.pop %v315
        %v340 = vmul.f32 %v315, %v339
        %vm341 = vcmp.eq.f32.partialorder %v315, inf
        %v342 = vsel %vm341, %v315, %v340
        %vm343 = vcmp.eq.f32.partialorder %v315, 0.0
        %v344 = vand.u32 %v315, 2147483648
        %v345 = vsel %vm343, %v344, %v342
        %v346 = vrsqrt.pop %v316
        %v347 = vmul.f32 %v316, %v346
        %vm348 = vcmp.eq.f32.partialorder %v316, inf
        %v349 = vsel %vm348, %v316, %v347
        %vm350 = vcmp.eq.f32.partialorder %v316, 0.0
        %v351 = vand.u32 %v316, 2147483648
        %v352 = vsel %vm350, %v351, %v349
        %v353 = vrsqrt.pop %v317
        %v354 = vmul.f32 %v317, %v353
        %vm355 = vcmp.eq.f32.partialorder %v317, inf
        %v356 = vsel %vm355, %v317, %v354
        %vm357 = vcmp.eq.f32.partialorder %v317, 0.0
        %v358 = vand.u32 %v317, 2147483648
        %v359 = vsel %vm357, %v358, %v356
        %v360 = vrsqrt.pop %v318
        %v361 = vmul.f32 %v318, %v360
        %vm362 = vcmp.eq.f32.partialorder %v318, inf
        %v363 = vsel %vm362, %v318, %v361
        %vm364 = vcmp.eq.f32.partialorder %v318, 0.0
        %v365 = vand.u32 %v318, 2147483648
        %v366 = vsel %vm364, %v365, %v363
        %v367 = vrsqrt.pop %v319
        %v368 = vmul.f32 %v319, %v367
        %vm369 = vcmp.eq.f32.partialorder %v319, inf
        %v370 = vsel %vm369, %v319, %v368
        %vm371 = vcmp.eq.f32.partialorder %v319, 0.0
        %v372 = vand.u32 %v319, 2147483648
        %v373 = vsel %vm371, %v372, %v370
        %v374 = vrsqrt.pop %v320
        %v375 = vmul.f32 %v320, %v374
        %vm376 = vcmp.eq.f32.partialorder %v320, inf
        %v377 = vsel %vm376, %v320, %v375
        %vm378 = vcmp.eq.f32.partialorder %v320, 0.0
        %v379 = vand.u32 %v320, 2147483648
        %v380 = vsel %vm378, %v379, %v377
        %v381 = vrsqrt.pop %v321
        %v382 = vmul.f32 %v321, %v381
        %vm383 = vcmp.eq.f32.partialorder %v321, inf
        %v384 = vsel %vm383, %v321, %v382
        %vm385 = vcmp.eq.f32.partialorder %v321, 0.0
        %v386 = vand.u32 %v321, 2147483648
        %v387 = vsel %vm385, %v386, %v384
        %v388 = vrsqrt.pop %v322
        %v389 = vmul.f32 %v322, %v388
        %vm390 = vcmp.eq.f32.partialorder %v322, inf
        %v391 = vsel %vm390, %v322, %v389
        %vm392 = vcmp.eq.f32.partialorder %v322, 0.0
        %v393 = vand.u32 %v322, 2147483648
        %v394 = vsel %vm392, %v393, %v391
        %v395 = vrsqrt.pop %v323
        %v396 = vmul.f32 %v323, %v395
        %vm397 = vcmp.eq.f32.partialorder %v323, inf
        %v398 = vsel %vm397, %v323, %v396
        %vm399 = vcmp.eq.f32.partialorder %v323, 0.0
        %v400 = vand.u32 %v323, 2147483648
        %v401 = vsel %vm399, %v400, %v398
        %v402 = vrsqrt.pop %v324
        %v403 = vmul.f32 %v324, %v402
        %vm404 = vcmp.eq.f32.partialorder %v324, inf
        %v405 = vsel %vm404, %v324, %v403
        %vm406 = vcmp.eq.f32.partialorder %v324, 0.0
        %v407 = vand.u32 %v324, 2147483648
        %v408 = vsel %vm406, %v407, %v405
        %v409 = vadd.f32 %v331, %v338
        %v410 = vadd.f32 %v359, %v366
        %v411 = vadd.f32 %v387, %v394
        %v412 = vadd.f32 %v313, %v314
        %v413 = vadd.f32 %v317, %v318
        %v414 = vadd.f32 %v321, %v322
        %v415 = vadd.f32 %v409, %v345
        %v416 = vadd.f32 %v410, %v373
        %v417 = vadd.f32 %v411, %v401
        %v418 = vadd.f32 %v412, %v315
        %v419 = vadd.f32 %v413, %v319
        %v420 = vadd.f32 %v414, %v323
        %v421 = vadd.f32 %v415, %v352
        %v422 = vadd.f32 %v416, %v380
        %v423 = vadd.f32 %v417, %v408
        %v424 = vadd.f32 %v418, %v316
        %v425 = vadd.f32 %v419, %v320
        %v426 = vadd.f32 %v420, %v324
        %v427 = vld [vmem:[#allocation2] sm:$0xff]
        %v428 = vld [vmem:[#allocation2 + $0x8] sm:$0xff]
        %v429 = vld [vmem:[#allocation2 + $0x10] sm:$0xff]
        %v430 = vadd.f32 %v427, %v421
        %v431 = vadd.f32 %v428, %v422
        %v432 = vadd.f32 %v429, %v423
        %433 = vst [vmem:[#allocation2] sm:$0xff] %v430
        %434 = vst [vmem:[#allocation2 + $0x8] sm:$0xff] %v431
        %435 = vst [vmem:[#allocation2 + $0x10] sm:$0xff] %v432
        %v436 = vld [vmem:[#allocation3] sm:$0xff]
        %v437 = vld [vmem:[#allocation3 + $0x8] sm:$0xff]
        %v438 = vld [vmem:[#allocation3 + $0x10] sm:$0xff]
        %v439 = vadd.f32 %v436, %v424
        %v440 = vadd.f32 %v437, %v425
        %v441 = vadd.f32 %v438, %v426
        %442 = vst [vmem:[#allocation3] sm:$0xff] %v439
        %443 = vst [vmem:[#allocation3 + $0x8] sm:$0xff] %v440
        %444 = vst [vmem:[#allocation3 + $0x10] sm:$0xff] %v441
        %p445 = scmp.eq.s32.totalorder %s20, 1
        %p446 = pnand %p445, %p167
        %p447 = pneg %p446
        // Predicated region
        $region37: #{tpu_custom_call.1} parent=27 // pred_check
          _
        $region38: #{tpu_custom_call.1} parent=27 // pred_check_branch
          %449 = sbr.rel (%p446) target = $region40
        $region39: #{tpu_custom_call.1} parent=27 // pred_region
          %v450 = vld [vmem:[#allocation2] sm:$0xff]
          %v451 = vld [vmem:[#allocation2 + $0x8] sm:$0xff]
          %v452 = vld [vmem:[#allocation2 + $0x10] sm:$0xff]
          %453 = vadd.xlane.f32.xlu0 %v450
          %v454 = vpop.xlane.xlu0 %453
          %455 = vadd.xlane.f32.xlu0 %v451
          %v456 = vpop.xlane.xlu0 %455
          %457 = vadd.xlane.f32.xlu0 %v452
          %v458 = vpop.xlane.xlu0 %457
          %v459 = vmul.f32 %v454, 0.0009765625
          %v460 = vmul.f32 %v456, 0.0009765625
          %v461 = vmul.f32 %v458, 0.0009765625
          %v462 = vld [vmem:[#allocation3] sm:$0xff]
          %v463 = vld [vmem:[#allocation3 + $0x8] sm:$0xff]
          %v464 = vld [vmem:[#allocation3 + $0x10] sm:$0xff]
          %465 = vadd.xlane.f32.xlu0 %v462
          %v466 = vpop.xlane.xlu0 %465
          %467 = vadd.xlane.f32.xlu0 %v463
          %v468 = vpop.xlane.xlu0 %467
          %469 = vadd.xlane.f32.xlu0 %v464
          %v470 = vpop.xlane.xlu0 %469
          %v471 = vmul.f32 %v466, 0.0009765625
          %v472 = vmul.f32 %v468, 0.0009765625
          %v473 = vmul.f32 %v470, 0.0009765625
          %v474 = vmul.f32 %v459, %v459
          %v475 = vmul.f32 %v460, %v460
          %v476 = vmul.f32 %v461, %v461
          %v477 = vsub.f32 %v471, %v474
          %v478 = vsub.f32 %v472, %v475
          %v479 = vsub.f32 %v473, %v476
          %v480 = vmax.f32 %v477, 0.0
          %v481 = vmax.f32 %v478, 0.0
          %v482 = vmax.f32 %v479, 0.0
          %v483 = vrsqrt.pop %v480
          %v484 = vmul.f32 %v480, %v483
          %vm485 = vcmp.eq.f32.partialorder %v480, inf
          %v486 = vsel %vm485, %v480, %v484
          %vm487 = vcmp.eq.f32.partialorder %v480, 0.0
          %v488 = vand.u32 %v480, 2147483648
          %v489 = vsel %vm487, %v488, %v486
          %v490 = vrsqrt.pop %v481
          %v491 = vmul.f32 %v481, %v490
          %vm492 = vcmp.eq.f32.partialorder %v481, inf
          %v493 = vsel %vm492, %v481, %v491
          %vm494 = vcmp.eq.f32.partialorder %v481, 0.0
          %v495 = vand.u32 %v481, 2147483648
          %v496 = vsel %vm494, %v495, %v493
          %v497 = vrsqrt.pop %v482
          %v498 = vmul.f32 %v482, %v497
          %vm499 = vcmp.eq.f32.partialorder %v482, inf
          %v500 = vsel %vm499, %v482, %v498
          %vm501 = vcmp.eq.f32.partialorder %v482, 0.0
          %v502 = vand.u32 %v482, 2147483648
          %v503 = vsel %vm501, %v502, %v500
          %v504 = vld [vmem:[%s0] sm:$0xff]
          %v505 = vld [vmem:[%s0 + $0x8] sm:$0xff]
          %v506 = vld [vmem:[%s0 + $0x10] sm:$0xff]
          %v507 = vmul.f32 %v504, 0.9
          %v508 = vmul.f32 %v505, 0.9
          %v509 = vmul.f32 %v506, 0.9
          %v510 = vmul.f32 %v489, 0.1
          %v511 = vmul.f32 %v496, 0.1
          %v512 = vmul.f32 %v503, 0.1
          %v513 = vadd.f32 %v507, %v510
          %v514 = vadd.f32 %v508, %v511
          %v515 = vadd.f32 %v509, %v512
          %vm516 = vcmask 7168
          %517 = vst.msk [vmem:[%s2] sm:$0xff] %vm516, %v513
          %518 = vst.msk [vmem:[%s2 + $0x8] sm:$0xff] %vm516, %v514
          %519 = vst.msk [vmem:[%s2 + $0x10] sm:$0xff] %vm516, %v515
        $region40: #{tpu_custom_call.1} parent=27 // pred_fallthru
          _
        // Predicated region
        $region41: #{tpu_custom_call.1} parent=27 // pred_check
          %p520 = pneg %p90
        $region42: #{tpu_custom_call.1} parent=27 // pred_check_branch
          %522 = sbr.rel (%p520) target = $region44
        $region43: #{tpu_custom_call.1} parent=27 // pred_region
          _
        $region44: #{tpu_custom_call.1} parent=27 // pred_fallthru
          _
        // Predicated region
        $region45: #{tpu_custom_call.1} parent=27 // pred_check
          %p523 = pneg %p90
        $region46: #{tpu_custom_call.1} parent=27 // pred_check_branch
          %525 = sbr.rel (%p523) target = $region48
        $region47: #{tpu_custom_call.1} parent=27 // pred_region
          _
        $region48: #{tpu_custom_call.1} parent=27 // pred_fallthru
          _
      $region28: #{tpu_custom_call.1} parent=5 // pred_fallthru
        _
      %p526 = scmp.le.s32.totalorder 2, %s11
      // Predicated region
      $region49: #{tpu_custom_call.1} parent=5 // pred_check
        %p527 = pneg %p526
      $region50: #{tpu_custom_call.1} parent=5 // pred_check_branch
        %529 = sbr.rel (%p527) target = $region52
      $region51: #{tpu_custom_call.1} parent=5 // pred_region
        %s530 = ssub.s32 %s11, 2
      $region52: #{tpu_custom_call.1} parent=5 // pred_fallthru
        _
    $region6: #{tpu_custom_call.1} parent=1 // loop_footer
      %s15 = sadd.s32 1, %s11
    $region7: #{tpu_custom_call.1} parent=1 // loop_footer_branch
      %10 = sbr.rel target = $region3
    $region8: #{tpu_custom_call.1} parent=1 // loop_exit
      _
    %531 = vsyncpa [#allocation5], 1
    %s532 = scalar_lea.sflag [#allocation5], 1
    %533 = vsyncpa %s532, 1

</llo_original>
